<compile_context>
chip_gen: v7x
topology: tpu7x:2x2x1
jax: 0.10.0
libtpu: 0.0.40
codegen_flags: <defaults>
</compile_context>

<pallas_src>
import math

import jax
import jax.numpy as jnp
from jax.experimental import pallas as pl
from jax.experimental.pallas import tpu as pltpu


def _leaky_relu(x, slope=0.2):
    return jnp.where(x >= 0, x, slope * x)


def renn_kernel(x_ref, w1_ref, b1_ref, w2_ref, b2_ref, o_ref):
    # Layer 1: bf16 MXU matmul, f32 accumulation, bias + LeakyReLU in f32.
    h = jnp.dot(x_ref[...], w1_ref[...], preferred_element_type=jnp.float32)
    h = _leaky_relu(h + b1_ref[...])

    # Layer 2: narrow (nclass-wide) bf16 matmul, f32 accumulation, f32 bias.
    z = jnp.dot(h.astype(w2_ref.dtype), w2_ref[...],
                preferred_element_type=jnp.float32)
    z = z + b2_ref[...]

    # Fused, numerically stable softmax over the class (lane) axis.
    z = z - jnp.max(z, axis=-1, keepdims=True)
    e = jnp.exp(z)
    o = e / jnp.sum(e, axis=-1, keepdims=True)

    o_ref[...] = o.astype(o_ref.dtype)


def renn_forward(x, w1, b1, w2, b2, *, tile_n=512):
    """x: [N, F]; w1: [F, H]; b1: [1, H]; w2: [H, C]; b2: [1, C] -> [N, C]."""
    n, nfeat = x.shape
    hid = w1.shape[1]
    nclass = w2.shape[1]

    # Matmul operands in bf16 (memory-bound on x; native MXU path), f32 biases.
    xb = x.astype(jnp.bfloat16)
    w1b = w1.astype(jnp.bfloat16)
    w2b = w2.astype(jnp.bfloat16)
    b1f = b1.astype(jnp.float32)
    b2f = b2.astype(jnp.float32)

    # Large, 8-aligned batch tile (second-to-last block dim must be 8-aligned).
    tile_n = max(8, min(tile_n, ((n + 7) // 8) * 8))
    grid = (pl.cdiv(n, tile_n),)

    return pl.pallas_call(
        renn_kernel,
        out_shape=jax.ShapeDtypeStruct((n, nclass), jnp.float32),
        grid=grid,
        in_specs=[
            # x: streamed per batch tile.
            pl.BlockSpec((tile_n, nfeat), lambda i: (i, 0)),
            # Weights / biases: full arrays, constant block index -> resident.
            pl.BlockSpec((nfeat, hid), lambda i: (0, 0)),
            pl.BlockSpec((1, hid), lambda i: (0, 0)),
            pl.BlockSpec((hid, nclass), lambda i: (0, 0)),
            pl.BlockSpec((1, nclass), lambda i: (0, 0)),
        ],
        out_specs=pl.BlockSpec((tile_n, nclass), lambda i: (i, 0)),
        compiler_params=pltpu.CompilerParams(
            dimension_semantics=("parallel",),
        ),
    )(xb, w1b, b1f, w2b, b2f)


def init_params(key, nfeat, hidden, nclass, dtype=jnp.float32):
    """Deterministic init matching nn.Linear's U(-1/sqrt(fan_in), 1/sqrt(fan_in))."""
    k1, k2, k3, k4 = jax.random.split(key, 4)
    bound1 = 1.0 / math.sqrt(nfeat)
    bound2 = 1.0 / math.sqrt(hidden)
    # Stored as (in, out) = transpose of PyTorch's (out, in) weight layout.
    w1 = jax.random.uniform(k1, (nfeat, hidden), dtype, -bound1, bound1)
    b1 = jax.random.uniform(k2, (1, hidden), dtype, -bound1, bound1)
    w2 = jax.random.uniform(k3, (hidden, nclass), dtype, -bound2, bound2)
    b2 = jax.random.uniform(k4, (1, nclass), dtype, -bound2, bound2)
    return w1, b1, w2, b2


def reference_forward(x, w1, b1, w2, b2):
    # Same bf16-input / f32-accumulation recipe as the kernel.
    xb = x.astype(jnp.bfloat16)
    w1b = w1.astype(jnp.bfloat16)
    w2b = w2.astype(jnp.bfloat16)
    h = jnp.dot(xb, w1b, preferred_element_type=jnp.float32) + b1
    h = _leaky_relu(h)
    z = jnp.dot(h.astype(jnp.bfloat16), w2b,
                preferred_element_type=jnp.float32) + b2
    return jax.nn.softmax(z, axis=-1)


if __name__ == "__main__":
    key = jax.random.PRNGKey(0)
    kx, kp = jax.random.split(key)

    batch = 512       # N rows (tiled over the grid: 2 tiles of 256)
    nfeat = 32        # input feature dim
    hidden = 64       # GraphNN hidden dim
    nclass = 8        # output classes (softmax axis)

    x = jax.random.normal(kx, (batch, nfeat), jnp.float32)
    w1, b1, w2, b2 = init_params(kp, nfeat, hidden, nclass)

    out = renn_forward(x, w1, b1, w2, b2, tile_n=256)
    out = jax.block_until_ready(out)

    ref = reference_forward(x, w1, b1, w2, b2)
    assert out.shape == (batch, nclass), out.shape
    assert bool(jnp.all(jnp.isfinite(out))), "non-finite output"
    # Softmax rows sum to ~1.
    assert jnp.allclose(jnp.sum(out, axis=-1), 1.0, atol=1e-3), "rows not normalized"
    # bf16 matmul inputs -> tolerance relaxed vs pure-f32 path.
    assert jnp.allclose(out, ref, atol=1e-2, rtol=1e-2), "mismatch vs reference"

    print("KERNEL_OK")
</pallas_src>

<mosaic_0001>
module attributes {stable_mosaic.version = 11 : i64} {
  func.func @renn_kernel(%arg0: i32, %arg1: memref<256x32xbf16, #tpu.memory_space<vmem>>, %arg2: memref<32x64xbf16, #tpu.memory_space<vmem>>, %arg3: memref<1x64xf32, #tpu.memory_space<vmem>>, %arg4: memref<64x8xbf16, #tpu.memory_space<vmem>>, %arg5: memref<1x8xf32, #tpu.memory_space<vmem>>, %arg6: memref<256x8xf32, #tpu.memory_space<vmem>>) attributes {dimension_semantics = [#tpu.dimension_semantics<parallel>], iteration_bounds = array<i64: 2>, scalar_prefetch = 0 : i64, scratch_operands = 0 : i64, tpu.core_type = #tpu.core_type<tc>, window_params = [{transform_indices = @transform_0, window_bounds = array<i64: 256, 32>}, {pipeline_mode = #tpu.pipeline_mode<synchronous>, transform_indices = @transform_1, window_bounds = array<i64: 32, 64>}, {pipeline_mode = #tpu.pipeline_mode<synchronous>, transform_indices = @transform_2, window_bounds = array<i64: 1, 64>}, {pipeline_mode = #tpu.pipeline_mode<synchronous>, transform_indices = @transform_3, window_bounds = array<i64: 64, 8>}, {pipeline_mode = #tpu.pipeline_mode<synchronous>, transform_indices = @transform_4, window_bounds = array<i64: 1, 8>}, {transform_indices = @transform_5, window_bounds = array<i64: 256, 8>}]} {
    %c0 = arith.constant 0 : index
    %c0_0 = arith.constant 0 : index
    %0 = vector.load %arg1[%c0, %c0_0] : memref<256x32xbf16, #tpu.memory_space<vmem>>, vector<256x32xbf16>
    %c0_1 = arith.constant 0 : index
    %c0_2 = arith.constant 0 : index
    %1 = vector.load %arg2[%c0_1, %c0_2] : memref<32x64xbf16, #tpu.memory_space<vmem>>, vector<32x64xbf16>
    %cst = arith.constant dense<0.000000e+00> : vector<256x64xf32>
    %2 = tpu.matmul %0, %1, %cst {dimension_numbers = #tpu.dot_dimension_numbers<[1], [0], [0], [1], [0, 0, 1, 1], [], []>} : vector<256x32xbf16>, vector<32x64xbf16>, vector<256x64xf32> -> vector<256x64xf32>
    %c0_3 = arith.constant 0 : index
    %c0_4 = arith.constant 0 : index
    %3 = vector.load %arg3[%c0_3, %c0_4] : memref<1x64xf32, #tpu.memory_space<vmem>>, vector<1x64xf32>
    %4 = vector.broadcast %3 : vector<1x64xf32> to vector<256x64xf32>
    %5 = arith.addf %2, %4 : vector<256x64xf32>
    %cst_5 = arith.constant 0.000000e+00 : f32
    %6 = vector.broadcast %cst_5 : f32 to vector<256x64xf32>
    %7 = arith.cmpf oge, %5, %6 : vector<256x64xf32>
    %cst_6 = arith.constant 2.000000e-01 : f32
    %8 = vector.broadcast %cst_6 : f32 to vector<256x64xf32>
    %9 = arith.mulf %8, %5 : vector<256x64xf32>
    %10 = arith.select %7, %5, %9 : vector<256x64xi1>, vector<256x64xf32>
    %11 = arith.truncf %10 : vector<256x64xf32> to vector<256x64xbf16>
    %c0_7 = arith.constant 0 : index
    %c0_8 = arith.constant 0 : index
    %12 = vector.load %arg4[%c0_7, %c0_8] : memref<64x8xbf16, #tpu.memory_space<vmem>>, vector<64x8xbf16>
    %cst_9 = arith.constant dense<0.000000e+00> : vector<256x8xf32>
    %13 = tpu.matmul %11, %12, %cst_9 {dimension_numbers = #tpu.dot_dimension_numbers<[1], [0], [0], [1], [0, 0, 1, 1], [], []>} : vector<256x64xbf16>, vector<64x8xbf16>, vector<256x8xf32> -> vector<256x8xf32>
    %c0_10 = arith.constant 0 : index
    %c0_11 = arith.constant 0 : index
    %14 = vector.load %arg5[%c0_10, %c0_11] : memref<1x8xf32, #tpu.memory_space<vmem>>, vector<1x8xf32>
    %15 = vector.broadcast %14 : vector<1x8xf32> to vector<256x8xf32>
    %16 = arith.addf %13, %15 : vector<256x8xf32>
    %cst_12 = arith.constant dense<0xFF800000> : vector<256xf32>
    %17 = vector.multi_reduction <maximumf>, %16, %cst_12 [1] : vector<256x8xf32> to vector<256xf32>
    %18 = vector.shape_cast %17 : vector<256xf32> to vector<256x1xf32>
    %19 = vector.broadcast %18 : vector<256x1xf32> to vector<256x8xf32>
    %20 = arith.subf %16, %19 : vector<256x8xf32>
    %21 = math.exp %20 : vector<256x8xf32>
    %cst_13 = arith.constant dense<0.000000e+00> : vector<256xf32>
    %22 = vector.multi_reduction <add>, %21, %cst_13 [1] : vector<256x8xf32> to vector<256xf32>
    %23 = vector.shape_cast %22 : vector<256xf32> to vector<256x1xf32>
    %24 = vector.broadcast %23 : vector<256x1xf32> to vector<256x8xf32>
    %25 = arith.divf %21, %24 : vector<256x8xf32>
    %c0_14 = arith.constant 0 : index
    %c0_15 = arith.constant 0 : index
    %26 = vector.load %arg6[%c0_14, %c0_15] : memref<256x8xf32, #tpu.memory_space<vmem>>, vector<256x8xf32>
    tpu.vector_store %arg6[%c0_14, %c0_15], %25 {strides = array<i32>} : memref<256x8xf32, #tpu.memory_space<vmem>>, vector<256x8xf32>,
    return
  }
  func.func @transform_0(%arg0: i32) -> (i32, i32) {
    %c0_i32 = arith.constant 0 : i32
    %c0_i32_0 = arith.constant 0 : i32
    return %arg0, %c0_i32 : i32, i32
  }
  func.func @transform_1(%arg0: i32) -> (i32, i32) {
    %c0_i32 = arith.constant 0 : i32
    %c0_i32_0 = arith.constant 0 : i32
    %c0_i32_1 = arith.constant 0 : i32
    return %c0_i32, %c0_i32_0 : i32, i32
  }
  func.func @transform_2(%arg0: i32) -> (i32, i32) {
    %c0_i32 = arith.constant 0 : i32
    %c0_i32_0 = arith.constant 0 : i32
    %c0_i32_1 = arith.constant 0 : i32
    return %c0_i32, %c0_i32_0 : i32, i32
  }
  func.func @transform_3(%arg0: i32) -> (i32, i32) {
    %c0_i32 = arith.constant 0 : i32
    %c0_i32_0 = arith.constant 0 : i32
    %c0_i32_1 = arith.constant 0 : i32
    return %c0_i32, %c0_i32_0 : i32, i32
  }
  func.func @transform_4(%arg0: i32) -> (i32, i32) {
    %c0_i32 = arith.constant 0 : i32
    %c0_i32_0 = arith.constant 0 : i32
    %c0_i32_1 = arith.constant 0 : i32
    return %c0_i32, %c0_i32_0 : i32, i32
  }
  func.func @transform_5(%arg0: i32) -> (i32, i32) {
    %c0_i32 = arith.constant 0 : i32
    %c0_i32_0 = arith.constant 0 : i32
    return %arg0, %c0_i32 : i32, i32
  }
}

</mosaic_0001>

<llo_original>
// kernel: tpu_custom_call.1
$region0: #{tpu_custom_call.1}
  #allocation0 [shape = 'u32[]', space=smem, size = 0x4, offset = 0x4, fixed_abs, tag = 'smem constant byte address 0x4 - core index']
  #allocation1 [shape = 'u32[144,128]{1,0:T(1,128)}', space=vmem, size = 0x12000, scoped, tag = 'internal scratch']
  %s0 = inlined_call_operand.vmem [shape: bf16[512,32], index: 0, kind: input, shape index: {}]
  %s1 = inlined_call_operand.vmem [shape: bf16[32,64], index: 1, kind: input, shape index: {}]
  %s2 = inlined_call_operand.vmem [shape: f32[1,64], index: 2, kind: input, shape index: {}]
  %s3 = inlined_call_operand.vmem [shape: bf16[64,8], index: 3, kind: input, shape index: {}]
  %s4 = inlined_call_operand.vmem [shape: f32[1,8], index: 4, kind: input, shape index: {}]
  %s5 = inlined_call_operand.vmem [shape: f32[512,8], index: 5, kind: output, shape index: {}]
  %s6 = sld [smem:[#allocation0]]
  $region53: #{tpu_custom_call.1} parent=0
    _
  %s8 = ssub.s32 1, %s6
  %s9 = scalar_select 0, %s8, %s6
  loop: start=0, step=1, limit=4
  $region2: #{tpu_custom_call.1} parent=0 // loop_pre_header
    _
  $region3: #{tpu_custom_call.1} parent=0 // loop_header
    %s11 = sphi 0, %s15
    %p12 = scmp.ge.s32.totalorder %s11, 4
    %s21 = sphi 0, %s23
    %s24 = sphi 0, %s21
    %s25 = sphi 0, %s24
    %s41 = sphi 0, %s25
    %s45 = sphi 0, %s45
    %s47 = sphi 0, %s45
    %s48 = sphi 0, %s47
    %s62 = sphi 0, %s48
    %s66 = sphi 0, %s66
    %s68 = sphi 0, %s66
    %s69 = sphi 0, %s68
    %s83 = sphi 0, %s69
    %s87 = sphi 0, %s87
    %s89 = sphi 0, %s87
    %s90 = sphi 0, %s89
    %s104 = sphi 0, %s90
    %s108 = sphi 0, %s108
    %s110 = sphi 0, %s108
    %s111 = sphi 0, %s110
    %s125 = sphi 0, %s111
    %s131 = sphi 0, %s133
    %s134 = sphi 0, %s131
    %s135 = sphi 0, %s134
    %s151 = sphi 0, %s135
  $region4: #{tpu_custom_call.1} parent=0 // loop_header_branch
    %14 = sbr.rel (%p12) target = $region8
  $region5: #{tpu_custom_call.1} parent=0 // loop_body
    %s16 = ssub.s32 %s11, 1
    %s17 = ssub.s32 %s11, 2
    %s18 = sadd.s32 %s11, 1
    %s19 = ssub.s32 %s11, %s18
    %p20 = scmp.eq.s32.totalorder %s19, 0
    %s22 = sadd.s32 %s21, 1
    %s23 = scalar_select %p20, %s21, %s22
    %p26 = pneg %p20
    %p27 = scmp.eq.s32.totalorder %s11, 1
    %p28 = por %p26, %p27
    %p29 = scmp.ne.s32.totalorder %s21, %s24
    %p30 = scmp.eq.s32.totalorder %s11, 0
    %p31 = por %p29, %p30
    %p32 = scmp.ne.s32.totalorder %s21, %s24
    %p33 = scmp.eq.s32.totalorder %s16, 1
    %p34 = por %p32, %p33
    %p35 = scmp.ne.s32.totalorder %s24, %s25
    %p36 = scmp.eq.s32.totalorder %s16, 0
    %p37 = por %p35, %p36
    %p38 = scmp.ne.s32.totalorder %s24, %s25
    %p39 = scmp.eq.s32.totalorder %s17, 1
    %p40 = por %p38, %p39
    %p42 = scmp.ne.s32.totalorder %s25, %s41
    %p43 = scmp.eq.s32.totalorder %s17, 0
    %p44 = por %p42, %p43
    %s46 = sadd.s32 %s45, 1
    %p49 = scmp.eq.s32.totalorder %s11, 1
    %p50 = scmp.ne.s32.totalorder %s45, %s47
    %p51 = scmp.eq.s32.totalorder %s11, 0
    %p52 = por %p50, %p51
    %p53 = scmp.ne.s32.totalorder %s45, %s47
    %p54 = scmp.eq.s32.totalorder %s16, 1
    %p55 = por %p53, %p54
    %p56 = scmp.ne.s32.totalorder %s47, %s48
    %p57 = scmp.eq.s32.totalorder %s16, 0
    %p58 = por %p56, %p57
    %p59 = scmp.ne.s32.totalorder %s47, %s48
    %p60 = scmp.eq.s32.totalorder %s17, 1
    %p61 = por %p59, %p60
    %p63 = scmp.ne.s32.totalorder %s48, %s62
    %p64 = scmp.eq.s32.totalorder %s17, 0
    %p65 = por %p63, %p64
    %s67 = sadd.s32 %s66, 1
    %p70 = scmp.eq.s32.totalorder %s11, 1
    %p71 = scmp.ne.s32.totalorder %s66, %s68
    %p72 = scmp.eq.s32.totalorder %s11, 0
    %p73 = por %p71, %p72
    %p74 = scmp.ne.s32.totalorder %s66, %s68
    %p75 = scmp.eq.s32.totalorder %s16, 1
    %p76 = por %p74, %p75
    %p77 = scmp.ne.s32.totalorder %s68, %s69
    %p78 = scmp.eq.s32.totalorder %s16, 0
    %p79 = por %p77, %p78
    %p80 = scmp.ne.s32.totalorder %s68, %s69
    %p81 = scmp.eq.s32.totalorder %s17, 1
    %p82 = por %p80, %p81
    %p84 = scmp.ne.s32.totalorder %s69, %s83
    %p85 = scmp.eq.s32.totalorder %s17, 0
    %p86 = por %p84, %p85
    %s88 = sadd.s32 %s87, 1
    %p91 = scmp.eq.s32.totalorder %s11, 1
    %p92 = scmp.ne.s32.totalorder %s87, %s89
    %p93 = scmp.eq.s32.totalorder %s11, 0
    %p94 = por %p92, %p93
    %p95 = scmp.ne.s32.totalorder %s87, %s89
    %p96 = scmp.eq.s32.totalorder %s16, 1
    %p97 = por %p95, %p96
    %p98 = scmp.ne.s32.totalorder %s89, %s90
    %p99 = scmp.eq.s32.totalorder %s16, 0
    %p100 = por %p98, %p99
    %p101 = scmp.ne.s32.totalorder %s89, %s90
    %p102 = scmp.eq.s32.totalorder %s17, 1
    %p103 = por %p101, %p102
    %p105 = scmp.ne.s32.totalorder %s90, %s104
    %p106 = scmp.eq.s32.totalorder %s17, 0
    %p107 = por %p105, %p106
    %s109 = sadd.s32 %s108, 1
    %p112 = scmp.eq.s32.totalorder %s11, 1
    %p113 = scmp.ne.s32.totalorder %s108, %s110
    %p114 = scmp.eq.s32.totalorder %s11, 0
    %p115 = por %p113, %p114
    %p116 = scmp.ne.s32.totalorder %s108, %s110
    %p117 = scmp.eq.s32.totalorder %s16, 1
    %p118 = por %p116, %p117
    %p119 = scmp.ne.s32.totalorder %s110, %s111
    %p120 = scmp.eq.s32.totalorder %s16, 0
    %p121 = por %p119, %p120
    %p122 = scmp.ne.s32.totalorder %s110, %s111
    %p123 = scmp.eq.s32.totalorder %s17, 1
    %p124 = por %p122, %p123
    %p126 = scmp.ne.s32.totalorder %s111, %s125
    %p127 = scmp.eq.s32.totalorder %s17, 0
    %p128 = por %p126, %p127
    %s129 = ssub.s32 %s11, %s18
    %p130 = scmp.eq.s32.totalorder %s129, 0
    %s132 = sadd.s32 %s131, 1
    %s133 = scalar_select %p130, %s131, %s132
    %p136 = pneg %p130
    %p137 = scmp.eq.s32.totalorder %s11, 1
    %p138 = por %p136, %p137
    %p139 = scmp.ne.s32.totalorder %s131, %s134
    %p140 = scmp.eq.s32.totalorder %s11, 0
    %p141 = por %p139, %p140
    %p142 = scmp.ne.s32.totalorder %s131, %s134
    %p143 = scmp.eq.s32.totalorder %s16, 1
    %p144 = por %p142, %p143
    %p145 = scmp.ne.s32.totalorder %s134, %s135
    %p146 = scmp.eq.s32.totalorder %s16, 0
    %p147 = por %p145, %p146
    %p148 = scmp.ne.s32.totalorder %s134, %s135
    %p149 = scmp.eq.s32.totalorder %s17, 1
    %p150 = por %p148, %p149
    %p152 = scmp.ne.s32.totalorder %s135, %s151
    %p153 = scmp.eq.s32.totalorder %s17, 0
    %p154 = por %p152, %p153
    %p155 = scmp.le.s32.totalorder 1, %s11
    %p156 = scmp.lt.s32.totalorder %s11, 3
    %p157 = pnand %p155, %p156
    %p158 = pneg %p157
    // Predicated region
    $region9: #{tpu_custom_call.1} parent=5 // pred_check
      _
    $region10: #{tpu_custom_call.1} parent=5 // pred_check_branch
      %160 = sbr.rel (%p157) target = $region12
    $region11: #{tpu_custom_call.1} parent=5 // pred_region
      %s161 = ssub.s32 %s11, 1
      // Predicated region
      $region13: #{tpu_custom_call.1} parent=11 // pred_check
        %p162 = pneg %p58
      $region14: #{tpu_custom_call.1} parent=11 // pred_check_branch
        %164 = sbr.rel (%p162) target = $region16
      $region15: #{tpu_custom_call.1} parent=11 // pred_region
        _
      $region16: #{tpu_custom_call.1} parent=11 // pred_fallthru
        _
      // Predicated region
      $region17: #{tpu_custom_call.1} parent=11 // pred_check
        %p165 = pneg %p79
      $region18: #{tpu_custom_call.1} parent=11 // pred_check_branch
        %167 = sbr.rel (%p165) target = $region20
      $region19: #{tpu_custom_call.1} parent=11 // pred_region
        _
      $region20: #{tpu_custom_call.1} parent=11 // pred_fallthru
        _
      // Predicated region
      $region21: #{tpu_custom_call.1} parent=11 // pred_check
        %p168 = pneg %p100
      $region22: #{tpu_custom_call.1} parent=11 // pred_check_branch
        %170 = sbr.rel (%p168) target = $region24
      $region23: #{tpu_custom_call.1} parent=11 // pred_region
        _
      $region24: #{tpu_custom_call.1} parent=11 // pred_fallthru
        _
      // Predicated region
      $region25: #{tpu_custom_call.1} parent=11 // pred_check
        %p171 = pneg %p121
      $region26: #{tpu_custom_call.1} parent=11 // pred_check_branch
        %173 = sbr.rel (%p171) target = $region28
      $region27: #{tpu_custom_call.1} parent=11 // pred_region
        _
      $region28: #{tpu_custom_call.1} parent=11 // pred_fallthru
        _
    $region12: #{tpu_custom_call.1} parent=5 // pred_fallthru
      _
    %p174 = scmp.lt.s32.totalorder %s11, 2
    // Predicated region
    $region29: #{tpu_custom_call.1} parent=5 // pred_check
      %p175 = pneg %p174
    $region30: #{tpu_custom_call.1} parent=5 // pred_check_branch
      %177 = sbr.rel (%p175) target = $region32
    $region31: #{tpu_custom_call.1} parent=5 // pred_region
      // Predicated region
      $region33: #{tpu_custom_call.1} parent=31 // pred_check
        %p178 = pneg %p31
      $region34: #{tpu_custom_call.1} parent=31 // pred_check_branch
        %180 = sbr.rel (%p178) target = $region36
      $region35: #{tpu_custom_call.1} parent=31 // pred_region
        %s181 = smul.u32 32, %s11
        %p182 = scmp.lt.s32.totalorder %s181, 63
        %s183 = scalar_select %p182, %s181, 63
        %s184 = smul.addr %s183, 4
        %s185 = scalar_lea.vmem %s0, %s184
        %s186 = smul.u32 32, %s11
      $region36: #{tpu_custom_call.1} parent=31 // pred_fallthru
        _
    $region32: #{tpu_custom_call.1} parent=5 // pred_fallthru
      _
    %p187 = scmp.le.s32.totalorder 1, %s11
    %p188 = scmp.lt.s32.totalorder %s11, 3
    %p189 = pnand %p187, %p188
    %p190 = pneg %p189
    // Predicated region
    $region37: #{tpu_custom_call.1} parent=5 // pred_check
      _
    $region38: #{tpu_custom_call.1} parent=5 // pred_check_branch
      %192 = sbr.rel (%p189) target = $region40
    $region39: #{tpu_custom_call.1} parent=5 // pred_region
      %s193 = ssub.s32 %s11, 1
      %s194 = smul.u32 32, %s16
      %p195 = scmp.lt.s32.totalorder %s194, 63
      %s196 = scalar_select %p195, %s194, 63
      %s197 = smul.addr %s196, 4
      %s198 = scalar_lea.vmem %s0, %s197
      %p199 = pneg %p37
      %p200 = pneg %p34
      %p201 = pneg %p58
      %p202 = pneg %p55
      %p203 = pneg %p79
      %p204 = pneg %p76
      %p205 = pneg %p100
      %p206 = pneg %p97
      %p207 = pneg %p121
      %p208 = pneg %p118
      %p209 = pneg %p147
      %p210 = pneg %p144
      %s211 = smul.u32 32, %s16
      %p212 = scmp.lt.s32.totalorder %s211, 63
      %s213 = scalar_select %p212, %s211, 63
      %s214 = smul.addr %s213, 8
      %s215 = scalar_lea.vmem %s5, %s214
      %s216 = smul.u32 32, %s16
      %p217 = scmp.lt.s32.totalorder %s216, 63
      %s218 = scalar_select %p217, %s216, 63
      %s219 = smul.addr %s218, 4
      %s220 = scalar_lea.vmem %s0, %s219
      %s221 = smul.u32 32, %s16
      %s222 = smul.u32 32, %s16
      %p223 = scmp.lt.s32.totalorder %s222, 63
      %s224 = scalar_select %p223, %s222, 63
      %s225 = smul.addr %s224, 8
      %s226 = scalar_lea.vmem %s5, %s225
      %s227 = smul.u32 32, %s16
      %v229 = vld [vmem:[%s220] sm:$0xf]
      %v230 = vld [vmem:[%s220 + $0x4] sm:$0xf]
      %v231 = vld [vmem:[%s220 + $0x8] sm:$0xf]
      %v232 = vld [vmem:[%s220 + $0xc] sm:$0xf]
      %v233 = vld [vmem:[%s220 + $0x10] sm:$0xf]
      %v234 = vld [vmem:[%s220 + $0x14] sm:$0xf]
      %v235 = vld [vmem:[%s220 + $0x18] sm:$0xf]
      %v236 = vld [vmem:[%s220 + $0x1c] sm:$0xf]
      %v237 = vld [vmem:[%s220 + $0x20] sm:$0xf]
      %v238 = vld [vmem:[%s220 + $0x24] sm:$0xf]
      %v239 = vld [vmem:[%s220 + $0x28] sm:$0xf]
      %v240 = vld [vmem:[%s220 + $0x2c] sm:$0xf]
      %v241 = vld [vmem:[%s220 + $0x30] sm:$0xf]
      %v242 = vld [vmem:[%s220 + $0x34] sm:$0xf]
      %v243 = vld [vmem:[%s220 + $0x38] sm:$0xf]
      %v244 = vld [vmem:[%s220 + $0x3c] sm:$0xf]
      %v245 = vld [vmem:[%s220 + $0x40] sm:$0xf]
      %v246 = vld [vmem:[%s220 + $0x44] sm:$0xf]
      %v247 = vld [vmem:[%s220 + $0x48] sm:$0xf]
      %v248 = vld [vmem:[%s220 + $0x4c] sm:$0xf]
      %v249 = vld [vmem:[%s220 + $0x50] sm:$0xf]
      %v250 = vld [vmem:[%s220 + $0x54] sm:$0xf]
      %v251 = vld [vmem:[%s220 + $0x58] sm:$0xf]
      %v252 = vld [vmem:[%s220 + $0x5c] sm:$0xf]
      %v253 = vld [vmem:[%s220 + $0x60] sm:$0xf]
      %v254 = vld [vmem:[%s220 + $0x64] sm:$0xf]
      %v255 = vld [vmem:[%s220 + $0x68] sm:$0xf]
      %v256 = vld [vmem:[%s220 + $0x6c] sm:$0xf]
      %v257 = vld [vmem:[%s220 + $0x70] sm:$0xf]
      %v258 = vld [vmem:[%s220 + $0x74] sm:$0xf]
      %v259 = vld [vmem:[%s220 + $0x78] sm:$0xf]
      %v260 = vld [vmem:[%s220 + $0x7c] sm:$0xf]
      %v261 = vld [vmem:[%s1] sm:$0xf]
      %v262 = vld [vmem:[%s1 + $0x4] sm:$0xf]
      %v263 = vld [vmem:[%s1 + $0x8] sm:$0xf]
      %v264 = vld [vmem:[%s1 + $0xc] sm:$0xf]
      %v265 = vld [vmem:[%s2] sm:$0x1]
      %v267 = vlaneseq
      %v268 = vshrl.u32 %v267, 7
      %v269 = vsub.s32 0, %v268
      %v270 = vrot.slane %v265, %v269
      %v304 = vunpack.c.l.b16 %v229
      %v305 = vunpack.c.l.b16 %v230
      %v306 = vunpack.c.l.b16 %v231
      %v307 = vunpack.c.l.b16 %v232
      %v308 = vunpack.c.l.b16 %v233
      %v309 = vunpack.c.l.b16 %v234
      %v310 = vunpack.c.l.b16 %v235
      %v311 = vunpack.c.l.b16 %v236
      %v312 = vunpack.c.l.b16 %v237
      %v313 = vunpack.c.l.b16 %v238
      %v314 = vunpack.c.l.b16 %v239
      %v315 = vunpack.c.l.b16 %v240
      %v316 = vunpack.c.l.b16 %v241
      %v317 = vunpack.c.l.b16 %v242
      %v318 = vunpack.c.l.b16 %v243
      %v319 = vunpack.c.l.b16 %v244
      %v320 = vunpack.c.l.b16 %v245
      %v321 = vunpack.c.l.b16 %v246
      %v322 = vunpack.c.l.b16 %v247
      %v323 = vunpack.c.l.b16 %v248
      %v324 = vunpack.c.l.b16 %v249
      %v325 = vunpack.c.l.b16 %v250
      %v326 = vunpack.c.l.b16 %v251
      %v327 = vunpack.c.l.b16 %v252
      %v328 = vunpack.c.l.b16 %v253
      %v329 = vunpack.c.l.b16 %v254
      %v330 = vunpack.c.l.b16 %v255
      %v331 = vunpack.c.l.b16 %v256
      %v332 = vunpack.c.l.b16 %v257
      %v333 = vunpack.c.l.b16 %v258
      %v334 = vunpack.c.l.b16 %v259
      %v335 = vunpack.c.l.b16 %v260
      %v336 = vpack.c.b16 %v305, %v304
      %v337 = vpack.c.b16 %v307, %v306
      %v338 = vpack.c.b16 %v309, %v308
      %v339 = vpack.c.b16 %v311, %v310
      %v340 = vpack.c.b16 %v313, %v312
      %v341 = vpack.c.b16 %v315, %v314
      %v342 = vpack.c.b16 %v317, %v316
      %v343 = vpack.c.b16 %v319, %v318
      %v344 = vpack.c.b16 %v321, %v320
      %v345 = vpack.c.b16 %v323, %v322
      %v346 = vpack.c.b16 %v325, %v324
      %v347 = vpack.c.b16 %v327, %v326
      %v348 = vpack.c.b16 %v329, %v328
      %v349 = vpack.c.b16 %v331, %v330
      %v350 = vpack.c.b16 %v333, %v332
      %v351 = vpack.c.b16 %v335, %v334
      %v356 = vunpack.c.l.b16 %v261
      %v357 = vunpack.c.l.b16 %v262
      %v358 = vunpack.c.l.b16 %v263
      %v359 = vunpack.c.l.b16 %v264
      %v360 = vpack.c.b16 %v357, %v356
      %v361 = vpack.c.b16 %v359, %v358
      %vm364 = vcmask 261120
      %v366 = vsel %vm364, %v336, 0
      %v369 = vsel %vm364, %v337, 0
      %v372 = vsel %vm364, %v338, 0
      %v375 = vsel %vm364, %v339, 0
      %v378 = vsel %vm364, %v340, 0
      %v381 = vsel %vm364, %v341, 0
      %v384 = vsel %vm364, %v342, 0
      %v387 = vsel %vm364, %v343, 0
      %v390 = vsel %vm364, %v344, 0
      %v393 = vsel %vm364, %v345, 0
      %v396 = vsel %vm364, %v346, 0
      %v399 = vsel %vm364, %v347, 0
      %v402 = vsel %vm364, %v348, 0
      %v405 = vsel %vm364, %v349, 0
      %v408 = vsel %vm364, %v350, 0
      %v411 = vsel %vm364, %v351, 0
      %413 = vmatprep.subr.bf16.mxu0 0
      %414 = vmatpush1.bf16.msra.mxu0 %v360
      %415 = vmatprep.subr.bf16.mxu0 0
      %416 = vmatpush1.bf16.msra.mxu0 %v361
      %417 = vmatprep.subr.bf16.mxu0 0
      %418 = vmatpush1.bf16.msra.mxu0 0
      %419 = vmatprep.subr.bf16.mxu0 0
      %420 = vmatpush1.bf16.msra.mxu0 0
      %421 = vmatprep.subr.bf16.mxu0 0
      %422 = vmatpush1.bf16.msra.mxu0 0
      %423 = vmatprep.subr.bf16.mxu0 0
      %424 = vmatpush1.bf16.msra.mxu0 0
      %425 = vmatprep.subr.bf16.mxu0 0
      %426 = vmatpush1.bf16.msra.mxu0 0
      %427 = vmatprep.subr.bf16.mxu0 0
      %428 = vmatpush1.bf16.msra.mxu0 0
      %429 = vmatprep.subr.bf16.mxu0 0
      %430 = vmatpush1.bf16.msra.mxu0 0
      %431 = vmatprep.subr.bf16.mxu0 0
      %432 = vmatpush1.bf16.msra.mxu0 0
      %433 = vmatprep.subr.bf16.mxu0 0
      %434 = vmatpush1.bf16.msra.mxu0 0
      %435 = vmatprep.subr.bf16.mxu0 0
      %436 = vmatpush1.bf16.msra.mxu0 0
      %437 = vmatprep.subr.bf16.mxu0 0
      %438 = vmatpush1.bf16.msra.mxu0 0
      %439 = vmatprep.subr.bf16.mxu0 0
      %440 = vmatpush1.bf16.msra.mxu0 0
      %441 = vmatprep.subr.bf16.mxu0 0
      %442 = vmatpush1.bf16.msra.mxu0 0
      %443 = vmatprep.subr.bf16.mxu0 0
      %444 = vmatpush1.bf16.msra.mxu0 0
      %445 = vmatprep.mubr.bf16.mxu0 0
      %446 = vmatmul.mubr.bf16.gmra.mrb[0].mxu0 %v366
      %v447 = vpop.f32.mrb[0].mxu0
      %v448 = vadd.f32 %v270, %v447
      %v449 = vpop.f32.mrb[0].mxu0
      %v450 = vpop.f32.mrb[0].mxu0
      %v451 = vadd.f32 %v270, %v450
      %v452 = vpop.f32.mrb[0].mxu0
      %453 = vmatprep.mubr.bf16.mxu0 0
      %454 = vmatmul.mubr.bf16.gmra.mrb[0].mxu0 %v369
      %v455 = vpop.f32.mrb[0].mxu0
      %v456 = vadd.f32 %v270, %v455
      %v457 = vpop.f32.mrb[0].mxu0
      %v458 = vpop.f32.mrb[0].mxu0
      %v459 = vadd.f32 %v270, %v458
      %v460 = vpop.f32.mrb[0].mxu0
      %461 = vmatprep.mubr.bf16.mxu0 0
      %462 = vmatmul.mubr.bf16.gmra.mrb[0].mxu0 %v372
      %v463 = vpop.f32.mrb[0].mxu0
      %v464 = vadd.f32 %v270, %v463
      %v465 = vpop.f32.mrb[0].mxu0
      %v466 = vpop.f32.mrb[0].mxu0
      %v467 = vadd.f32 %v270, %v466
      %v468 = vpop.f32.mrb[0].mxu0
      %469 = vmatprep.mubr.bf16.mxu0 0
      %470 = vmatmul.mubr.bf16.gmra.mrb[0].mxu0 %v375
      %v471 = vpop.f32.mrb[0].mxu0
      %v472 = vadd.f32 %v270, %v471
      %v473 = vpop.f32.mrb[0].mxu0
      %v474 = vpop.f32.mrb[0].mxu0
      %v475 = vadd.f32 %v270, %v474
      %v476 = vpop.f32.mrb[0].mxu0
      %477 = vmatprep.mubr.bf16.mxu0 0
      %478 = vmatmul.mubr.bf16.gmra.mrb[0].mxu0 %v378
      %v479 = vpop.f32.mrb[0].mxu0
      %v480 = vadd.f32 %v270, %v479
      %v481 = vpop.f32.mrb[0].mxu0
      %v482 = vpop.f32.mrb[0].mxu0
      %v483 = vadd.f32 %v270, %v482
      %v484 = vpop.f32.mrb[0].mxu0
      %485 = vmatprep.mubr.bf16.mxu0 0
      %486 = vmatmul.mubr.bf16.gmra.mrb[0].mxu0 %v381
      %v487 = vpop.f32.mrb[0].mxu0
      %v488 = vadd.f32 %v270, %v487
      %v489 = vpop.f32.mrb[0].mxu0
      %v490 = vpop.f32.mrb[0].mxu0
      %v491 = vadd.f32 %v270, %v490
      %v492 = vpop.f32.mrb[0].mxu0
      %493 = vmatprep.mubr.bf16.mxu0 0
      %494 = vmatmul.mubr.bf16.gmra.mrb[0].mxu0 %v384
      %v495 = vpop.f32.mrb[0].mxu0
      %v496 = vadd.f32 %v270, %v495
      %v497 = vpop.f32.mrb[0].mxu0
      %v498 = vpop.f32.mrb[0].mxu0
      %v499 = vadd.f32 %v270, %v498
      %v500 = vpop.f32.mrb[0].mxu0
      %501 = vmatprep.mubr.bf16.mxu0 0
      %502 = vmatmul.mubr.bf16.gmra.mrb[0].mxu0 %v387
      %v503 = vpop.f32.mrb[0].mxu0
      %v504 = vadd.f32 %v270, %v503
      %v505 = vpop.f32.mrb[0].mxu0
      %v506 = vpop.f32.mrb[0].mxu0
      %v507 = vadd.f32 %v270, %v506
      %v508 = vpop.f32.mrb[0].mxu0
      %509 = vmatprep.mubr.bf16.mxu0 0
      %510 = vmatmul.mubr.bf16.gmra.mrb[0].mxu0 %v390
      %v511 = vpop.f32.mrb[0].mxu0
      %v512 = vadd.f32 %v270, %v511
      %v513 = vpop.f32.mrb[0].mxu0
      %v514 = vpop.f32.mrb[0].mxu0
      %v515 = vadd.f32 %v270, %v514
      %v516 = vpop.f32.mrb[0].mxu0
      %517 = vmatprep.mubr.bf16.mxu0 0
      %518 = vmatmul.mubr.bf16.gmra.mrb[0].mxu0 %v393
      %v519 = vpop.f32.mrb[0].mxu0
      %v520 = vadd.f32 %v270, %v519
      %v521 = vpop.f32.mrb[0].mxu0
      %v522 = vpop.f32.mrb[0].mxu0
      %v523 = vadd.f32 %v270, %v522
      %v524 = vpop.f32.mrb[0].mxu0
      %525 = vmatprep.mubr.bf16.mxu0 0
      %526 = vmatmul.mubr.bf16.gmra.mrb[0].mxu0 %v396
      %v527 = vpop.f32.mrb[0].mxu0
      %v528 = vadd.f32 %v270, %v527
      %v529 = vpop.f32.mrb[0].mxu0
      %v530 = vpop.f32.mrb[0].mxu0
      %v531 = vadd.f32 %v270, %v530
      %v532 = vpop.f32.mrb[0].mxu0
      %533 = vmatprep.mubr.bf16.mxu0 0
      %534 = vmatmul.mubr.bf16.gmra.mrb[0].mxu0 %v399
      %v535 = vpop.f32.mrb[0].mxu0
      %v536 = vadd.f32 %v270, %v535
      %v537 = vpop.f32.mrb[0].mxu0
      %v538 = vpop.f32.mrb[0].mxu0
      %v539 = vadd.f32 %v270, %v538
      %v540 = vpop.f32.mrb[0].mxu0
      %541 = vmatprep.mubr.bf16.mxu0 0
      %542 = vmatmul.mubr.bf16.gmra.mrb[0].mxu0 %v402
      %v543 = vpop.f32.mrb[0].mxu0
      %v544 = vadd.f32 %v270, %v543
      %v545 = vpop.f32.mrb[0].mxu0
      %v546 = vpop.f32.mrb[0].mxu0
      %v547 = vadd.f32 %v270, %v546
      %v548 = vpop.f32.mrb[0].mxu0
      %549 = vmatprep.mubr.bf16.mxu0 0
      %550 = vmatmul.mubr.bf16.gmra.mrb[0].mxu0 %v405
      %v551 = vpop.f32.mrb[0].mxu0
      %v552 = vadd.f32 %v270, %v551
      %v553 = vpop.f32.mrb[0].mxu0
      %v554 = vpop.f32.mrb[0].mxu0
      %v555 = vadd.f32 %v270, %v554
      %v556 = vpop.f32.mrb[0].mxu0
      %557 = vmatprep.mubr.bf16.mxu0 0
      %558 = vmatmul.mubr.bf16.gmra.mrb[0].mxu0 %v408
      %v559 = vpop.f32.mrb[0].mxu0
      %v560 = vadd.f32 %v270, %v559
      %v561 = vpop.f32.mrb[0].mxu0
      %v562 = vpop.f32.mrb[0].mxu0
      %v563 = vadd.f32 %v270, %v562
      %v564 = vpop.f32.mrb[0].mxu0
      %565 = vmatprep.mubr.bf16.mxu0 0
      %566 = vmatmul.mubr.bf16.gmra.mrb[0].mxu0 %v411
      %v567 = vpop.f32.mrb[0].mxu0
      %v568 = vadd.f32 %v270, %v567
      %v569 = vpop.f32.mrb[0].mxu0
      %v570 = vpop.f32.mrb[0].mxu0
      %v571 = vadd.f32 %v270, %v570
      %v572 = vpop.f32.mrb[0].mxu0
      %573 = vdwg.mxu0
      %vm574 = vcmp.ge.f32.partialorder %v448, 0.0
      %vm575 = vcmp.ge.f32.partialorder %v451, 0.0
      %vm576 = vcmp.ge.f32.partialorder %v456, 0.0
      %vm577 = vcmp.ge.f32.partialorder %v459, 0.0
      %vm578 = vcmp.ge.f32.partialorder %v464, 0.0
      %vm579 = vcmp.ge.f32.partialorder %v467, 0.0
      %vm580 = vcmp.ge.f32.partialorder %v472, 0.0
      %vm581 = vcmp.ge.f32.partialorder %v475, 0.0
      %vm582 = vcmp.ge.f32.partialorder %v480, 0.0
      %vm583 = vcmp.ge.f32.partialorder %v483, 0.0
      %vm584 = vcmp.ge.f32.partialorder %v488, 0.0
      %vm585 = vcmp.ge.f32.partialorder %v491, 0.0
      %vm586 = vcmp.ge.f32.partialorder %v496, 0.0
      %vm587 = vcmp.ge.f32.partialorder %v499, 0.0
      %vm588 = vcmp.ge.f32.partialorder %v504, 0.0
      %vm589 = vcmp.ge.f32.partialorder %v507, 0.0
      %vm590 = vcmp.ge.f32.partialorder %v512, 0.0
      %vm591 = vcmp.ge.f32.partialorder %v515, 0.0
      %vm592 = vcmp.ge.f32.partialorder %v520, 0.0
      %vm593 = vcmp.ge.f32.partialorder %v523, 0.0
      %vm594 = vcmp.ge.f32.partialorder %v528, 0.0
      %vm595 = vcmp.ge.f32.partialorder %v531, 0.0
      %vm596 = vcmp.ge.f32.partialorder %v536, 0.0
      %vm597 = vcmp.ge.f32.partialorder %v539, 0.0
      %vm598 = vcmp.ge.f32.partialorder %v544, 0.0
      %vm599 = vcmp.ge.f32.partialorder %v547, 0.0
      %vm600 = vcmp.ge.f32.partialorder %v552, 0.0
      %vm601 = vcmp.ge.f32.partialorder %v555, 0.0
      %vm602 = vcmp.ge.f32.partialorder %v560, 0.0
      %vm603 = vcmp.ge.f32.partialorder %v563, 0.0
      %vm604 = vcmp.ge.f32.partialorder %v568, 0.0
      %vm605 = vcmp.ge.f32.partialorder %v571, 0.0
      %v606 = vmul.f32 %v448, 0.2
      %v607 = vmul.f32 %v451, 0.2
      %v608 = vmul.f32 %v456, 0.2
      %v609 = vmul.f32 %v459, 0.2
      %v610 = vmul.f32 %v464, 0.2
      %v611 = vmul.f32 %v467, 0.2
      %v612 = vmul.f32 %v472, 0.2
      %v613 = vmul.f32 %v475, 0.2
      %v614 = vmul.f32 %v480, 0.2
      %v615 = vmul.f32 %v483, 0.2
      %v616 = vmul.f32 %v488, 0.2
      %v617 = vmul.f32 %v491, 0.2
      %v618 = vmul.f32 %v496, 0.2
      %v619 = vmul.f32 %v499, 0.2
      %v620 = vmul.f32 %v504, 0.2
      %v621 = vmul.f32 %v507, 0.2
      %v622 = vmul.f32 %v512, 0.2
      %v623 = vmul.f32 %v515, 0.2
      %v624 = vmul.f32 %v520, 0.2
      %v625 = vmul.f32 %v523, 0.2
      %v626 = vmul.f32 %v528, 0.2
      %v627 = vmul.f32 %v531, 0.2
      %v628 = vmul.f32 %v536, 0.2
      %v629 = vmul.f32 %v539, 0.2
      %v630 = vmul.f32 %v544, 0.2
      %v631 = vmul.f32 %v547, 0.2
      %v632 = vmul.f32 %v552, 0.2
      %v633 = vmul.f32 %v555, 0.2
      %v634 = vmul.f32 %v560, 0.2
      %v635 = vmul.f32 %v563, 0.2
      %v636 = vmul.f32 %v568, 0.2
      %v637 = vmul.f32 %v571, 0.2
      %v638 = vsel %vm574, %v448, %v606
      %v639 = vsel %vm575, %v451, %v607
      %v640 = vsel %vm576, %v456, %v608
      %v641 = vsel %vm577, %v459, %v609
      %v642 = vsel %vm578, %v464, %v610
      %v643 = vsel %vm579, %v467, %v611
      %v644 = vsel %vm580, %v472, %v612
      %v645 = vsel %vm581, %v475, %v613
      %v646 = vsel %vm582, %v480, %v614
      %v647 = vsel %vm583, %v483, %v615
      %v648 = vsel %vm584, %v488, %v616
      %v649 = vsel %vm585, %v491, %v617
      %v650 = vsel %vm586, %v496, %v618
      %v651 = vsel %vm587, %v499, %v619
      %v652 = vsel %vm588, %v504, %v620
      %v653 = vsel %vm589, %v507, %v621
      %v654 = vsel %vm590, %v512, %v622
      %v655 = vsel %vm591, %v515, %v623
      %v656 = vsel %vm592, %v520, %v624
      %v657 = vsel %vm593, %v523, %v625
      %v658 = vsel %vm594, %v528, %v626
      %v659 = vsel %vm595, %v531, %v627
      %v660 = vsel %vm596, %v536, %v628
      %v661 = vsel %vm597, %v539, %v629
      %v662 = vsel %vm598, %v544, %v630
      %v663 = vsel %vm599, %v547, %v631
      %v664 = vsel %vm600, %v552, %v632
      %v665 = vsel %vm601, %v555, %v633
      %v666 = vsel %vm602, %v560, %v634
      %v667 = vsel %vm603, %v563, %v635
      %v668 = vsel %vm604, %v568, %v636
      %v669 = vsel %vm605, %v571, %v637
      %v670 = vpack.c.bf16 %v639, %v638
      %v671 = vpack.c.bf16 %v641, %v640
      %v672 = vpack.c.bf16 %v643, %v642
      %v673 = vpack.c.bf16 %v645, %v644
      %v674 = vpack.c.bf16 %v647, %v646
      %v675 = vpack.c.bf16 %v649, %v648
      %v676 = vpack.c.bf16 %v651, %v650
      %v677 = vpack.c.bf16 %v653, %v652
      %v678 = vpack.c.bf16 %v655, %v654
      %v679 = vpack.c.bf16 %v657, %v656
      %v680 = vpack.c.bf16 %v659, %v658
      %v681 = vpack.c.bf16 %v661, %v660
      %v682 = vpack.c.bf16 %v663, %v662
      %v683 = vpack.c.bf16 %v665, %v664
      %v684 = vpack.c.bf16 %v667, %v666
      %v685 = vpack.c.bf16 %v669, %v668
      %v686 = vld [vmem:[%s3] sm:$0xf]
      %v687 = vld [vmem:[%s3 + $0x4] sm:$0xf]
      %v688 = vld [vmem:[%s3 + $0x8] sm:$0xf]
      %v689 = vld [vmem:[%s3 + $0xc] sm:$0xf]
      %v690 = vld [vmem:[%s3 + $0x10] sm:$0xf]
      %v691 = vld [vmem:[%s3 + $0x14] sm:$0xf]
      %v692 = vld [vmem:[%s3 + $0x18] sm:$0xf]
      %v693 = vld [vmem:[%s3 + $0x1c] sm:$0xf]
      %v694 = vld [vmem:[%s4] sm:$0x1]
      %v696 = vlaneseq
      %v697 = vshrl.u32 %v696, 7
      %v698 = vsub.s32 0, %v697
      %v699 = vrot.slane %v694, %v698
      %v709 = vunpack.c.l.b16 %v686
      %v710 = vunpack.c.l.b16 %v687
      %v711 = vunpack.c.l.b16 %v688
      %v712 = vunpack.c.l.b16 %v689
      %v713 = vunpack.c.l.b16 %v690
      %v714 = vunpack.c.l.b16 %v691
      %v715 = vunpack.c.l.b16 %v692
      %v716 = vunpack.c.l.b16 %v693
      %v717 = vpack.c.b16 %v710, %v709
      %v718 = vpack.c.b16 %v712, %v711
      %v719 = vpack.c.b16 %v714, %v713
      %v720 = vpack.c.b16 %v716, %v715
      %vm725 = vcmask 523264
      %v727 = vsel %vm725, %v670, 0
      %v730 = vsel %vm725, %v671, 0
      %v733 = vsel %vm725, %v672, 0
      %v736 = vsel %vm725, %v673, 0
      %v739 = vsel %vm725, %v674, 0
      %v742 = vsel %vm725, %v675, 0
      %v745 = vsel %vm725, %v676, 0
      %v748 = vsel %vm725, %v677, 0
      %v751 = vsel %vm725, %v678, 0
      %v754 = vsel %vm725, %v679, 0
      %v757 = vsel %vm725, %v680, 0
      %v760 = vsel %vm725, %v681, 0
      %v763 = vsel %vm725, %v682, 0
      %v766 = vsel %vm725, %v683, 0
      %v769 = vsel %vm725, %v684, 0
      %v772 = vsel %vm725, %v685, 0
      %774 = vmatprep.subr.bf16.mxu0 0
      %775 = vmatpush1.bf16.msra.mxu0 %v717
      %776 = vmatprep.subr.bf16.mxu0 0
      %777 = vmatpush1.bf16.msra.mxu0 %v718
      %778 = vmatprep.subr.bf16.mxu0 0
      %779 = vmatpush1.bf16.msra.mxu0 %v719
      %780 = vmatprep.subr.bf16.mxu0 0
      %781 = vmatpush1.bf16.msra.mxu0 %v720
      %782 = vmatprep.subr.bf16.mxu0 0
      %783 = vmatpush1.bf16.msra.mxu0 0
      %784 = vmatprep.subr.bf16.mxu0 0
      %785 = vmatpush1.bf16.msra.mxu0 0
      %786 = vmatprep.subr.bf16.mxu0 0
      %787 = vmatpush1.bf16.msra.mxu0 0
      %788 = vmatprep.subr.bf16.mxu0 0
      %789 = vmatpush1.bf16.msra.mxu0 0
      %790 = vmatprep.subr.bf16.mxu0 0
      %791 = vmatpush1.bf16.msra.mxu0 0
      %792 = vmatprep.subr.bf16.mxu0 0
      %793 = vmatpush1.bf16.msra.mxu0 0
      %794 = vmatprep.subr.bf16.mxu0 0
      %795 = vmatpush1.bf16.msra.mxu0 0
      %796 = vmatprep.subr.bf16.mxu0 0
      %797 = vmatpush1.bf16.msra.mxu0 0
      %798 = vmatprep.subr.bf16.mxu0 0
      %799 = vmatpush1.bf16.msra.mxu0 0
      %800 = vmatprep.subr.bf16.mxu0 0
      %801 = vmatpush1.bf16.msra.mxu0 0
      %802 = vmatprep.subr.bf16.mxu0 0
      %803 = vmatpush1.bf16.msra.mxu0 0
      %804 = vmatprep.subr.bf16.mxu0 0
      %805 = vmatpush1.bf16.msra.mxu0 0
      %806 = vmatprep.mubr.bf16.mxu0 0
      %807 = vmatmul.mubr.bf16.gmra.mrb[0].mxu0 %v727
      %v808 = vpop.f32.mrb[0].mxu0
      %v809 = vadd.f32 %v699, %v808
      %v810 = vpop.f32.mrb[0].mxu0
      %v811 = vpop.f32.mrb[0].mxu0
      %v812 = vadd.f32 %v699, %v811
      %v813 = vpop.f32.mrb[0].mxu0
      %814 = vmatprep.mubr.bf16.mxu0 0
      %815 = vmatmul.mubr.bf16.gmra.mrb[0].mxu0 %v730
      %v816 = vpop.f32.mrb[0].mxu0
      %v817 = vadd.f32 %v699, %v816
      %v818 = vpop.f32.mrb[0].mxu0
      %v819 = vpop.f32.mrb[0].mxu0
      %v820 = vadd.f32 %v699, %v819
      %v821 = vpop.f32.mrb[0].mxu0
      %822 = vmatprep.mubr.bf16.mxu0 0
      %823 = vmatmul.mubr.bf16.gmra.mrb[0].mxu0 %v733
      %v824 = vpop.f32.mrb[0].mxu0
      %v825 = vadd.f32 %v699, %v824
      %v826 = vpop.f32.mrb[0].mxu0
      %v827 = vpop.f32.mrb[0].mxu0
      %v828 = vadd.f32 %v699, %v827
      %v829 = vpop.f32.mrb[0].mxu0
      %830 = vmatprep.mubr.bf16.mxu0 0
      %831 = vmatmul.mubr.bf16.gmra.mrb[0].mxu0 %v736
      %v832 = vpop.f32.mrb[0].mxu0
      %v833 = vadd.f32 %v699, %v832
      %v834 = vpop.f32.mrb[0].mxu0
      %v835 = vpop.f32.mrb[0].mxu0
      %v836 = vadd.f32 %v699, %v835
      %v837 = vpop.f32.mrb[0].mxu0
      %838 = vmatprep.mubr.bf16.mxu0 0
      %839 = vmatmul.mubr.bf16.gmra.mrb[0].mxu0 %v739
      %v840 = vpop.f32.mrb[0].mxu0
      %v841 = vadd.f32 %v699, %v840
      %v842 = vpop.f32.mrb[0].mxu0
      %v843 = vpop.f32.mrb[0].mxu0
      %v844 = vadd.f32 %v699, %v843
      %v845 = vpop.f32.mrb[0].mxu0
      %846 = vmatprep.mubr.bf16.mxu0 0
      %847 = vmatmul.mubr.bf16.gmra.mrb[0].mxu0 %v742
      %v848 = vpop.f32.mrb[0].mxu0
      %v849 = vadd.f32 %v699, %v848
      %v850 = vpop.f32.mrb[0].mxu0
      %v851 = vpop.f32.mrb[0].mxu0
      %v852 = vadd.f32 %v699, %v851
      %v853 = vpop.f32.mrb[0].mxu0
      %854 = vmatprep.mubr.bf16.mxu0 0
      %855 = vmatmul.mubr.bf16.gmra.mrb[0].mxu0 %v745
      %v856 = vpop.f32.mrb[0].mxu0
      %v857 = vadd.f32 %v699, %v856
      %v858 = vpop.f32.mrb[0].mxu0
      %v859 = vpop.f32.mrb[0].mxu0
      %v860 = vadd.f32 %v699, %v859
      %v861 = vpop.f32.mrb[0].mxu0
      %862 = vmatprep.mubr.bf16.mxu0 0
      %863 = vmatmul.mubr.bf16.gmra.mrb[0].mxu0 %v748
      %v864 = vpop.f32.mrb[0].mxu0
      %v865 = vadd.f32 %v699, %v864
      %v866 = vpop.f32.mrb[0].mxu0
      %v867 = vpop.f32.mrb[0].mxu0
      %v868 = vadd.f32 %v699, %v867
      %v869 = vpop.f32.mrb[0].mxu0
      %870 = vmatprep.mubr.bf16.mxu0 0
      %871 = vmatmul.mubr.bf16.gmra.mrb[0].mxu0 %v751
      %v872 = vpop.f32.mrb[0].mxu0
      %v873 = vadd.f32 %v699, %v872
      %v874 = vpop.f32.mrb[0].mxu0
      %v875 = vpop.f32.mrb[0].mxu0
      %v876 = vadd.f32 %v699, %v875
      %v877 = vpop.f32.mrb[0].mxu0
      %878 = vmatprep.mubr.bf16.mxu0 0
      %879 = vmatmul.mubr.bf16.gmra.mrb[0].mxu0 %v754
      %v880 = vpop.f32.mrb[0].mxu0
      %v881 = vadd.f32 %v699, %v880
      %v882 = vpop.f32.mrb[0].mxu0
      %v883 = vpop.f32.mrb[0].mxu0
      %v884 = vadd.f32 %v699, %v883
      %v885 = vpop.f32.mrb[0].mxu0
      %886 = vmatprep.mubr.bf16.mxu0 0
      %887 = vmatmul.mubr.bf16.gmra.mrb[0].mxu0 %v757
      %v888 = vpop.f32.mrb[0].mxu0
      %v889 = vadd.f32 %v699, %v888
      %v890 = vpop.f32.mrb[0].mxu0
      %v891 = vpop.f32.mrb[0].mxu0
      %v892 = vadd.f32 %v699, %v891
      %v893 = vpop.f32.mrb[0].mxu0
      %894 = vmatprep.mubr.bf16.mxu0 0
      %895 = vmatmul.mubr.bf16.gmra.mrb[0].mxu0 %v760
      %v896 = vpop.f32.mrb[0].mxu0
      %v897 = vadd.f32 %v699, %v896
      %v898 = vpop.f32.mrb[0].mxu0
      %v899 = vpop.f32.mrb[0].mxu0
      %v900 = vadd.f32 %v699, %v899
      %v901 = vpop.f32.mrb[0].mxu0
      %902 = vmatprep.mubr.bf16.mxu0 0
      %903 = vmatmul.mubr.bf16.gmra.mrb[0].mxu0 %v763
      %v904 = vpop.f32.mrb[0].mxu0
      %v905 = vadd.f32 %v699, %v904
      %v906 = vpop.f32.mrb[0].mxu0
      %v907 = vpop.f32.mrb[0].mxu0
      %v908 = vadd.f32 %v699, %v907
      %v909 = vpop.f32.mrb[0].mxu0
      %910 = vmatprep.mubr.bf16.mxu0 0
      %911 = vmatmul.mubr.bf16.gmra.mrb[0].mxu0 %v766
      %v912 = vpop.f32.mrb[0].mxu0
      %v913 = vadd.f32 %v699, %v912
      %v914 = vpop.f32.mrb[0].mxu0
      %v915 = vpop.f32.mrb[0].mxu0
      %v916 = vadd.f32 %v699, %v915
      %v917 = vpop.f32.mrb[0].mxu0
      %918 = vmatprep.mubr.bf16.mxu0 0
      %919 = vmatmul.mubr.bf16.gmra.mrb[0].mxu0 %v769
      %v920 = vpop.f32.mrb[0].mxu0
      %v921 = vadd.f32 %v699, %v920
      %v922 = vpop.f32.mrb[0].mxu0
      %v923 = vpop.f32.mrb[0].mxu0
      %v924 = vadd.f32 %v699, %v923
      %v925 = vpop.f32.mrb[0].mxu0
      %926 = vmatprep.mubr.bf16.mxu0 0
      %927 = vmatmul.mubr.bf16.gmra.mrb[0].mxu0 %v772
      %v928 = vpop.f32.mrb[0].mxu0
      %v929 = vadd.f32 %v699, %v928
      %v930 = vpop.f32.mrb[0].mxu0
      %v931 = vpop.f32.mrb[0].mxu0
      %v932 = vadd.f32 %v699, %v931
      %v933 = vpop.f32.mrb[0].mxu0
      %934 = vdwg.mxu0
      %vm935 = vcmask 64512
      %v936 = vsel %vm935, %v809, -inf
      %937 = vmax.xlane.f32.xlu0 %v936
      %v938 = vpop.xlane.xlu0 %937
      %v939 = vsel %vm935, %v812, -inf
      %940 = vmax.xlane.f32.xlu0 %v939
      %v941 = vpop.xlane.xlu0 %940
      %v942 = vsel %vm935, %v817, -inf
      %943 = vmax.xlane.f32.xlu0 %v942
      %v944 = vpop.xlane.xlu0 %943
      %v945 = vsel %vm935, %v820, -inf
      %946 = vmax.xlane.f32.xlu0 %v945
      %v947 = vpop.xlane.xlu0 %946
      %v948 = vsel %vm935, %v825, -inf
      %949 = vmax.xlane.f32.xlu0 %v948
      %v950 = vpop.xlane.xlu0 %949
      %v951 = vsel %vm935, %v828, -inf
      %952 = vmax.xlane.f32.xlu0 %v951
      %v953 = vpop.xlane.xlu0 %952
      %v954 = vsel %vm935, %v833, -inf
      %955 = vmax.xlane.f32.xlu0 %v954
      %v956 = vpop.xlane.xlu0 %955
      %v957 = vsel %vm935, %v836, -inf
      %958 = vmax.xlane.f32.xlu0 %v957
      %v959 = vpop.xlane.xlu0 %958
      %v960 = vsel %vm935, %v841, -inf
      %961 = vmax.xlane.f32.xlu0 %v960
      %v962 = vpop.xlane.xlu0 %961
      %v963 = vsel %vm935, %v844, -inf
      %964 = vmax.xlane.f32.xlu0 %v963
      %v965 = vpop.xlane.xlu0 %964
      %v966 = vsel %vm935, %v849, -inf
      %967 = vmax.xlane.f32.xlu0 %v966
      %v968 = vpop.xlane.xlu0 %967
      %v969 = vsel %vm935, %v852, -inf
      %970 = vmax.xlane.f32.xlu0 %v969
      %v971 = vpop.xlane.xlu0 %970
      %v972 = vsel %vm935, %v857, -inf
      %973 = vmax.xlane.f32.xlu0 %v972
      %v974 = vpop.xlane.xlu0 %973
      %v975 = vsel %vm935, %v860, -inf
      %976 = vmax.xlane.f32.xlu0 %v975
      %v977 = vpop.xlane.xlu0 %976
      %v978 = vsel %vm935, %v865, -inf
      %979 = vmax.xlane.f32.xlu0 %v978
      %v980 = vpop.xlane.xlu0 %979
      %v981 = vsel %vm935, %v868, -inf
      %982 = vmax.xlane.f32.xlu0 %v981
      %v983 = vpop.xlane.xlu0 %982
      %v984 = vsel %vm935, %v873, -inf
      %985 = vmax.xlane.f32.xlu0 %v984
      %v986 = vpop.xlane.xlu0 %985
      %v987 = vsel %vm935, %v876, -inf
      %988 = vmax.xlane.f32.xlu0 %v987
      %v989 = vpop.xlane.xlu0 %988
      %v990 = vsel %vm935, %v881, -inf
      %991 = vmax.xlane.f32.xlu0 %v990
      %v992 = vpop.xlane.xlu0 %991
      %v993 = vsel %vm935, %v884, -inf
      %994 = vmax.xlane.f32.xlu0 %v993
      %v995 = vpop.xlane.xlu0 %994
      %v996 = vsel %vm935, %v889, -inf
      %997 = vmax.xlane.f32.xlu0 %v996
      %v998 = vpop.xlane.xlu0 %997
      %v999 = vsel %vm935, %v892, -inf
      %1000 = vmax.xlane.f32.xlu0 %v999
      %v1001 = vpop.xlane.xlu0 %1000
      %v1002 = vsel %vm935, %v897, -inf
      %1003 = vmax.xlane.f32.xlu0 %v1002
      %v1004 = vpop.xlane.xlu0 %1003
      %v1005 = vsel %vm935, %v900, -inf
      %1006 = vmax.xlane.f32.xlu0 %v1005
      %v1007 = vpop.xlane.xlu0 %1006
      %v1008 = vsel %vm935, %v905, -inf
      %1009 = vmax.xlane.f32.xlu0 %v1008
      %v1010 = vpop.xlane.xlu0 %1009
      %v1011 = vsel %vm935, %v908, -inf
      %1012 = vmax.xlane.f32.xlu0 %v1011
      %v1013 = vpop.xlane.xlu0 %1012
      %v1014 = vsel %vm935, %v913, -inf
      %1015 = vmax.xlane.f32.xlu0 %v1014
      %v1016 = vpop.xlane.xlu0 %1015
      %v1017 = vsel %vm935, %v916, -inf
      %1018 = vmax.xlane.f32.xlu0 %v1017
      %v1019 = vpop.xlane.xlu0 %1018
      %v1020 = vsel %vm935, %v921, -inf
      %1021 = vmax.xlane.f32.xlu0 %v1020
      %v1022 = vpop.xlane.xlu0 %1021
      %v1023 = vsel %vm935, %v924, -inf
      %1024 = vmax.xlane.f32.xlu0 %v1023
      %v1025 = vpop.xlane.xlu0 %1024
      %v1026 = vsel %vm935, %v929, -inf
      %1027 = vmax.xlane.f32.xlu0 %v1026
      %v1028 = vpop.xlane.xlu0 %1027
      %v1029 = vsel %vm935, %v932, -inf
      %1030 = vmax.xlane.f32.xlu0 %v1029
      %v1031 = vpop.xlane.xlu0 %1030
      %v1032 = vsub.f32 %v809, %v938
      %v1033 = vsub.f32 %v812, %v941
      %v1034 = vsub.f32 %v817, %v944
      %v1035 = vsub.f32 %v820, %v947
      %v1036 = vsub.f32 %v825, %v950
      %v1037 = vsub.f32 %v828, %v953
      %v1038 = vsub.f32 %v833, %v956
      %v1039 = vsub.f32 %v836, %v959
      %v1040 = vsub.f32 %v841, %v962
      %v1041 = vsub.f32 %v844, %v965
      %v1042 = vsub.f32 %v849, %v968
      %v1043 = vsub.f32 %v852, %v971
      %v1044 = vsub.f32 %v857, %v974
      %v1045 = vsub.f32 %v860, %v977
      %v1046 = vsub.f32 %v865, %v980
      %v1047 = vsub.f32 %v868, %v983
      %v1048 = vsub.f32 %v873, %v986
      %v1049 = vsub.f32 %v876, %v989
      %v1050 = vsub.f32 %v881, %v992
      %v1051 = vsub.f32 %v884, %v995
      %v1052 = vsub.f32 %v889, %v998
      %v1053 = vsub.f32 %v892, %v1001
      %v1054 = vsub.f32 %v897, %v1004
      %v1055 = vsub.f32 %v900, %v1007
      %v1056 = vsub.f32 %v905, %v1010
      %v1057 = vsub.f32 %v908, %v1013
      %v1058 = vsub.f32 %v913, %v1016
      %v1059 = vsub.f32 %v916, %v1019
      %v1060 = vsub.f32 %v921, %v1022
      %v1061 = vsub.f32 %v924, %v1025
      %v1062 = vsub.f32 %v929, %v1028
      %v1063 = vsub.f32 %v932, %v1031
      %v1064 = vmul.f32 %v1032, 1.442695
      %v1065 = vpow.pop %v1064
      %v1066 = vmul.f32 %v1033, 1.442695
      %v1067 = vpow.pop %v1066
      %v1068 = vmul.f32 %v1034, 1.442695
      %v1069 = vpow.pop %v1068
      %v1070 = vmul.f32 %v1035, 1.442695
      %v1071 = vpow.pop %v1070
      %v1072 = vmul.f32 %v1036, 1.442695
      %v1073 = vpow.pop %v1072
      %v1074 = vmul.f32 %v1037, 1.442695
      %v1075 = vpow.pop %v1074
      %v1076 = vmul.f32 %v1038, 1.442695
      %v1077 = vpow.pop %v1076
      %v1078 = vmul.f32 %v1039, 1.442695
      %v1079 = vpow.pop %v1078
      %v1080 = vmul.f32 %v1040, 1.442695
      %v1081 = vpow.pop %v1080
      %v1082 = vmul.f32 %v1041, 1.442695
      %v1083 = vpow.pop %v1082
      %v1084 = vmul.f32 %v1042, 1.442695
      %v1085 = vpow.pop %v1084
      %v1086 = vmul.f32 %v1043, 1.442695
      %v1087 = vpow.pop %v1086
      %v1088 = vmul.f32 %v1044, 1.442695
      %v1089 = vpow.pop %v1088
      %v1090 = vmul.f32 %v1045, 1.442695
      %v1091 = vpow.pop %v1090
      %v1092 = vmul.f32 %v1046, 1.442695
      %v1093 = vpow.pop %v1092
      %v1094 = vmul.f32 %v1047, 1.442695
      %v1095 = vpow.pop %v1094
      %v1096 = vmul.f32 %v1048, 1.442695
      %v1097 = vpow.pop %v1096
      %v1098 = vmul.f32 %v1049, 1.442695
      %v1099 = vpow.pop %v1098
      %v1100 = vmul.f32 %v1050, 1.442695
      %v1101 = vpow.pop %v1100
      %v1102 = vmul.f32 %v1051, 1.442695
      %v1103 = vpow.pop %v1102
      %v1104 = vmul.f32 %v1052, 1.442695
      %v1105 = vpow.pop %v1104
      %v1106 = vmul.f32 %v1053, 1.442695
      %v1107 = vpow.pop %v1106
      %v1108 = vmul.f32 %v1054, 1.442695
      %v1109 = vpow.pop %v1108
      %v1110 = vmul.f32 %v1055, 1.442695
      %v1111 = vpow.pop %v1110
      %v1112 = vmul.f32 %v1056, 1.442695
      %v1113 = vpow.pop %v1112
      %v1114 = vmul.f32 %v1057, 1.442695
      %v1115 = vpow.pop %v1114
      %v1116 = vmul.f32 %v1058, 1.442695
      %v1117 = vpow.pop %v1116
      %v1118 = vmul.f32 %v1059, 1.442695
      %v1119 = vpow.pop %v1118
      %v1120 = vmul.f32 %v1060, 1.442695
      %v1121 = vpow.pop %v1120
      %v1122 = vmul.f32 %v1061, 1.442695
      %v1123 = vpow.pop %v1122
      %v1124 = vmul.f32 %v1062, 1.442695
      %v1125 = vpow.pop %v1124
      %v1126 = vmul.f32 %v1063, 1.442695
      %v1127 = vpow.pop %v1126
      %v1128 = vsel %vm935, %v1065, 0.0
      %1129 = vadd.xlane.f32.xlu0 %v1128
      %v1130 = vpop.xlane.xlu0 %1129
      %v1131 = vsel %vm935, %v1067, 0.0
      %1132 = vadd.xlane.f32.xlu0 %v1131
      %v1133 = vpop.xlane.xlu0 %1132
      %v1134 = vsel %vm935, %v1069, 0.0
      %1135 = vadd.xlane.f32.xlu0 %v1134
      %v1136 = vpop.xlane.xlu0 %1135
      %v1137 = vsel %vm935, %v1071, 0.0
      %1138 = vadd.xlane.f32.xlu0 %v1137
      %v1139 = vpop.xlane.xlu0 %1138
      %v1140 = vsel %vm935, %v1073, 0.0
      %1141 = vadd.xlane.f32.xlu0 %v1140
      %v1142 = vpop.xlane.xlu0 %1141
      %v1143 = vsel %vm935, %v1075, 0.0
      %1144 = vadd.xlane.f32.xlu0 %v1143
      %v1145 = vpop.xlane.xlu0 %1144
      %v1146 = vsel %vm935, %v1077, 0.0
      %1147 = vadd.xlane.f32.xlu0 %v1146
      %v1148 = vpop.xlane.xlu0 %1147
      %v1149 = vsel %vm935, %v1079, 0.0
      %1150 = vadd.xlane.f32.xlu0 %v1149
      %v1151 = vpop.xlane.xlu0 %1150
      %v1152 = vsel %vm935, %v1081, 0.0
      %1153 = vadd.xlane.f32.xlu0 %v1152
      %v1154 = vpop.xlane.xlu0 %1153
      %v1155 = vsel %vm935, %v1083, 0.0
      %1156 = vadd.xlane.f32.xlu0 %v1155
      %v1157 = vpop.xlane.xlu0 %1156
      %v1158 = vsel %vm935, %v1085, 0.0
      %1159 = vadd.xlane.f32.xlu0 %v1158
      %v1160 = vpop.xlane.xlu0 %1159
      %v1161 = vsel %vm935, %v1087, 0.0
      %1162 = vadd.xlane.f32.xlu0 %v1161
      %v1163 = vpop.xlane.xlu0 %1162
      %v1164 = vsel %vm935, %v1089, 0.0
      %1165 = vadd.xlane.f32.xlu0 %v1164
      %v1166 = vpop.xlane.xlu0 %1165
      %v1167 = vsel %vm935, %v1091, 0.0
      %1168 = vadd.xlane.f32.xlu0 %v1167
      %v1169 = vpop.xlane.xlu0 %1168
      %v1170 = vsel %vm935, %v1093, 0.0
      %1171 = vadd.xlane.f32.xlu0 %v1170
      %v1172 = vpop.xlane.xlu0 %1171
      %v1173 = vsel %vm935, %v1095, 0.0
      %1174 = vadd.xlane.f32.xlu0 %v1173
      %v1175 = vpop.xlane.xlu0 %1174
      %v1176 = vsel %vm935, %v1097, 0.0
      %1177 = vadd.xlane.f32.xlu0 %v1176
      %v1178 = vpop.xlane.xlu0 %1177
      %v1179 = vsel %vm935, %v1099, 0.0
      %1180 = vadd.xlane.f32.xlu0 %v1179
      %v1181 = vpop.xlane.xlu0 %1180
      %v1182 = vsel %vm935, %v1101, 0.0
      %1183 = vadd.xlane.f32.xlu0 %v1182
      %v1184 = vpop.xlane.xlu0 %1183
      %v1185 = vsel %vm935, %v1103, 0.0
      %1186 = vadd.xlane.f32.xlu0 %v1185
      %v1187 = vpop.xlane.xlu0 %1186
      %v1188 = vsel %vm935, %v1105, 0.0
      %1189 = vadd.xlane.f32.xlu0 %v1188
      %v1190 = vpop.xlane.xlu0 %1189
      %v1191 = vsel %vm935, %v1107, 0.0
      %1192 = vadd.xlane.f32.xlu0 %v1191
      %v1193 = vpop.xlane.xlu0 %1192
      %v1194 = vsel %vm935, %v1109, 0.0
      %1195 = vadd.xlane.f32.xlu0 %v1194
      %v1196 = vpop.xlane.xlu0 %1195
      %v1197 = vsel %vm935, %v1111, 0.0
      %1198 = vadd.xlane.f32.xlu0 %v1197
      %v1199 = vpop.xlane.xlu0 %1198
      %v1200 = vsel %vm935, %v1113, 0.0
      %1201 = vadd.xlane.f32.xlu0 %v1200
      %v1202 = vpop.xlane.xlu0 %1201
      %v1203 = vsel %vm935, %v1115, 0.0
      %1204 = vadd.xlane.f32.xlu0 %v1203
      %v1205 = vpop.xlane.xlu0 %1204
      %v1206 = vsel %vm935, %v1117, 0.0
      %1207 = vadd.xlane.f32.xlu0 %v1206
      %v1208 = vpop.xlane.xlu0 %1207
      %v1209 = vsel %vm935, %v1119, 0.0
      %1210 = vadd.xlane.f32.xlu0 %v1209
      %v1211 = vpop.xlane.xlu0 %1210
      %v1212 = vsel %vm935, %v1121, 0.0
      %1213 = vadd.xlane.f32.xlu0 %v1212
      %v1214 = vpop.xlane.xlu0 %1213
      %v1215 = vsel %vm935, %v1123, 0.0
      %1216 = vadd.xlane.f32.xlu0 %v1215
      %v1217 = vpop.xlane.xlu0 %1216
      %v1218 = vsel %vm935, %v1125, 0.0
      %1219 = vadd.xlane.f32.xlu0 %v1218
      %v1220 = vpop.xlane.xlu0 %1219
      %v1221 = vsel %vm935, %v1127, 0.0
      %1222 = vadd.xlane.f32.xlu0 %v1221
      %v1223 = vpop.xlane.xlu0 %1222
      %v1224 = vrcp.pop %v1130
      %v1225 = vmul.f32 %v1065, %v1224
      %v1226 = vrcp.pop %v1133
      %v1227 = vmul.f32 %v1067, %v1226
      %v1228 = vrcp.pop %v1136
      %v1229 = vmul.f32 %v1069, %v1228
      %v1230 = vrcp.pop %v1139
      %v1231 = vmul.f32 %v1071, %v1230
      %v1232 = vrcp.pop %v1142
      %v1233 = vmul.f32 %v1073, %v1232
      %v1234 = vrcp.pop %v1145
      %v1235 = vmul.f32 %v1075, %v1234
      %v1236 = vrcp.pop %v1148
      %v1237 = vmul.f32 %v1077, %v1236
      %v1238 = vrcp.pop %v1151
      %v1239 = vmul.f32 %v1079, %v1238
      %v1240 = vrcp.pop %v1154
      %v1241 = vmul.f32 %v1081, %v1240
      %v1242 = vrcp.pop %v1157
      %v1243 = vmul.f32 %v1083, %v1242
      %v1244 = vrcp.pop %v1160
      %v1245 = vmul.f32 %v1085, %v1244
      %v1246 = vrcp.pop %v1163
      %v1247 = vmul.f32 %v1087, %v1246
      %v1248 = vrcp.pop %v1166
      %v1249 = vmul.f32 %v1089, %v1248
      %v1250 = vrcp.pop %v1169
      %v1251 = vmul.f32 %v1091, %v1250
      %v1252 = vrcp.pop %v1172
      %v1253 = vmul.f32 %v1093, %v1252
      %v1254 = vrcp.pop %v1175
      %v1255 = vmul.f32 %v1095, %v1254
      %v1256 = vrcp.pop %v1178
      %v1257 = vmul.f32 %v1097, %v1256
      %v1258 = vrcp.pop %v1181
      %v1259 = vmul.f32 %v1099, %v1258
      %v1260 = vrcp.pop %v1184
      %v1261 = vmul.f32 %v1101, %v1260
      %v1262 = vrcp.pop %v1187
      %v1263 = vmul.f32 %v1103, %v1262
      %v1264 = vrcp.pop %v1190
      %v1265 = vmul.f32 %v1105, %v1264
      %v1266 = vrcp.pop %v1193
      %v1267 = vmul.f32 %v1107, %v1266
      %v1268 = vrcp.pop %v1196
      %v1269 = vmul.f32 %v1109, %v1268
      %v1270 = vrcp.pop %v1199
      %v1271 = vmul.f32 %v1111, %v1270
      %v1272 = vrcp.pop %v1202
      %v1273 = vmul.f32 %v1113, %v1272
      %v1274 = vrcp.pop %v1205
      %v1275 = vmul.f32 %v1115, %v1274
      %v1276 = vrcp.pop %v1208
      %v1277 = vmul.f32 %v1117, %v1276
      %v1278 = vrcp.pop %v1211
      %v1279 = vmul.f32 %v1119, %v1278
      %v1280 = vrcp.pop %v1214
      %v1281 = vmul.f32 %v1121, %v1280
      %v1282 = vrcp.pop %v1217
      %v1283 = vmul.f32 %v1123, %v1282
      %v1284 = vrcp.pop %v1220
      %v1285 = vmul.f32 %v1125, %v1284
      %v1286 = vrcp.pop %v1223
      %v1287 = vmul.f32 %v1127, %v1286
      %1288 = vst.msk [vmem:[%s226] sm:$0xff] %vm935, %v1225
      %1289 = vst.msk [vmem:[%s226 + $0x8] sm:$0xff] %vm935, %v1227
      %1290 = vst.msk [vmem:[%s226 + $0x10] sm:$0xff] %vm935, %v1229
      %1291 = vst.msk [vmem:[%s226 + $0x18] sm:$0xff] %vm935, %v1231
      %1292 = vst.msk [vmem:[%s226 + $0x20] sm:$0xff] %vm935, %v1233
      %1293 = vst.msk [vmem:[%s226 + $0x28] sm:$0xff] %vm935, %v1235
      %1294 = vst.msk [vmem:[%s226 + $0x30] sm:$0xff] %vm935, %v1237
      %1295 = vst.msk [vmem:[%s226 + $0x38] sm:$0xff] %vm935, %v1239
      %1296 = vst.msk [vmem:[%s226 + $0x40] sm:$0xff] %vm935, %v1241
      %1297 = vst.msk [vmem:[%s226 + $0x48] sm:$0xff] %vm935, %v1243
      %1298 = vst.msk [vmem:[%s226 + $0x50] sm:$0xff] %vm935, %v1245
      %1299 = vst.msk [vmem:[%s226 + $0x58] sm:$0xff] %vm935, %v1247
      %1300 = vst.msk [vmem:[%s226 + $0x60] sm:$0xff] %vm935, %v1249
      %1301 = vst.msk [vmem:[%s226 + $0x68] sm:$0xff] %vm935, %v1251
      %1302 = vst.msk [vmem:[%s226 + $0x70] sm:$0xff] %vm935, %v1253
      %1303 = vst.msk [vmem:[%s226 + $0x78] sm:$0xff] %vm935, %v1255
      %1304 = vst.msk [vmem:[%s226 + $0x80] sm:$0xff] %vm935, %v1257
      %1305 = vst.msk [vmem:[%s226 + $0x88] sm:$0xff] %vm935, %v1259
      %1306 = vst.msk [vmem:[%s226 + $0x90] sm:$0xff] %vm935, %v1261
      %1307 = vst.msk [vmem:[%s226 + $0x98] sm:$0xff] %vm935, %v1263
      %1308 = vst.msk [vmem:[%s226 + $0xa0] sm:$0xff] %vm935, %v1265
      %1309 = vst.msk [vmem:[%s226 + $0xa8] sm:$0xff] %vm935, %v1267
      %1310 = vst.msk [vmem:[%s226 + $0xb0] sm:$0xff] %vm935, %v1269
      %1311 = vst.msk [vmem:[%s226 + $0xb8] sm:$0xff] %vm935, %v1271
      %1312 = vst.msk [vmem:[%s226 + $0xc0] sm:$0xff] %vm935, %v1273
      %1313 = vst.msk [vmem:[%s226 + $0xc8] sm:$0xff] %vm935, %v1275
      %1314 = vst.msk [vmem:[%s226 + $0xd0] sm:$0xff] %vm935, %v1277
      %1315 = vst.msk [vmem:[%s226 + $0xd8] sm:$0xff] %vm935, %v1279
      %1316 = vst.msk [vmem:[%s226 + $0xe0] sm:$0xff] %vm935, %v1281
      %1317 = vst.msk [vmem:[%s226 + $0xe8] sm:$0xff] %vm935, %v1283
      %1318 = vst.msk [vmem:[%s226 + $0xf0] sm:$0xff] %vm935, %v1285
      %1319 = vst.msk [vmem:[%s226 + $0xf8] sm:$0xff] %vm935, %v1287
      %s1320 = smul.u32 32, %s16
      %p1321 = scmp.lt.s32.totalorder %s1320, 63
      %s1322 = scalar_select %p1321, %s1320, 63
      %s1323 = smul.addr %s1322, 8
      %s1324 = scalar_lea.vmem %s5, %s1323
      // Predicated region
      $region41: #{tpu_custom_call.1} parent=39 // pred_check
        %p1325 = pneg %p144
      $region42: #{tpu_custom_call.1} parent=39 // pred_check_branch
        %1327 = sbr.rel (%p1325) target = $region44
      $region43: #{tpu_custom_call.1} parent=39 // pred_region
        %s1328 = smul.u32 32, %s16
      $region44: #{tpu_custom_call.1} parent=39 // pred_fallthru
        _
    $region40: #{tpu_custom_call.1} parent=5 // pred_fallthru
      _
    %p1329 = scmp.le.s32.totalorder 2, %s11
    // Predicated region
    $region45: #{tpu_custom_call.1} parent=5 // pred_check
      %p1330 = pneg %p1329
    $region46: #{tpu_custom_call.1} parent=5 // pred_check_branch
      %1332 = sbr.rel (%p1330) target = $region48
    $region47: #{tpu_custom_call.1} parent=5 // pred_region
      %s1333 = ssub.s32 %s11, 2
      // Predicated region
      $region49: #{tpu_custom_call.1} parent=47 // pred_check
        %p1334 = pneg %p150
      $region50: #{tpu_custom_call.1} parent=47 // pred_check_branch
        %1336 = sbr.rel (%p1334) target = $region52
      $region51: #{tpu_custom_call.1} parent=47 // pred_region
        %s1337 = smul.u32 32, %s17
        %p1338 = scmp.lt.s32.totalorder %s1337, 63
        %s1339 = scalar_select %p1338, %s1337, 63
        %s1340 = smul.addr %s1339, 8
        %s1341 = scalar_lea.vmem %s5, %s1340
      $region52: #{tpu_custom_call.1} parent=47 // pred_fallthru
        _
    $region48: #{tpu_custom_call.1} parent=5 // pred_fallthru
      _
  $region6: #{tpu_custom_call.1} parent=0 // loop_footer
    %s15 = sadd.s32 1, %s11
  $region7: #{tpu_custom_call.1} parent=0 // loop_footer_branch
    %10 = sbr.rel target = $region3
  $region8: #{tpu_custom_call.1} parent=0 // loop_exit
    _

</llo_original>
